<compile_context>
chip_gen: v7x
topology: tpu7x:2x2x1
jax: 0.10.0
libtpu: 0.0.40
codegen_flags: <defaults>
</compile_context>

<pallas_src>
import functools

import numpy as np
import jax
import jax.numpy as jnp
from jax import lax
from jax.experimental import pallas as pl
from jax.experimental.pallas import tpu as pltpu


LANE = 128


def _round_up(x, m):
    return (x + m - 1) // m * m


# ----------------------------------------------------------------------------
# Fused kernel: reservoir fixed-point iteration + (optional) pooling + readout.
# ----------------------------------------------------------------------------
def _graphesn_fused_kernel(*refs, has_pool, threshold_sq, max_steps,
                           check_every):
    if has_pool:
        (u_ref, win_t_ref, wh_t_ref, a_ref, pool_ref, coef_t_ref, b_ref,
         scores_ref, x_f32, x_bf16, xin_ref, done_ref) = refs
    else:
        (u_ref, win_t_ref, wh_t_ref, a_ref, coef_t_ref, b_ref,
         scores_ref, x_f32, x_bf16, xin_ref, done_ref) = refs
        pool_ref = None

    # Loop-invariant input projection: computed ONCE (hoisted out of the loop).
    # bf16 operands, f32 accumulation, stored in a f32 VMEM scratch.
    xin_ref[...] = jnp.dot(u_ref[...], win_t_ref[...],
                           preferred_element_type=jnp.float32)

    # x_old initialised to zeros (x_neighbors is None in the reference forward).
    x_f32[...] = jnp.zeros_like(x_f32)
    x_bf16[...] = jnp.zeros_like(x_bf16)
    done_ref[0] = jnp.int32(0)

    def body(step, carry):
        def run_iter():
            # x = W_h @ x_old  ->  x_old_bf16 @ W_h^T   (bf16 operands, f32 acc)
            xh = jnp.dot(x_bf16[...], wh_t_ref[...],
                         preferred_element_type=jnp.float32)
            # neighbors = propagate(edge_index, x) == A @ xh
            neigh = jnp.dot(a_ref[...], xh.astype(jnp.bfloat16),
                            preferred_element_type=jnp.float32)
            # x = tanh(W_in @ u_in + neighbors)   (elementwise in f32)
            x_new = jnp.tanh(xin_ref[...] + neigh)

            def do_check():
                diff = x_new - x_f32[...]                         # f32 vs f32
                sq = jnp.sum(diff * diff)                         # sqrt-free
                done_ref[0] = jnp.where(sq <= threshold_sq,
                                        jnp.int32(1), jnp.int32(0))

            if check_every <= 1:
                do_check()                    # exact PyTorch while-loop check
            else:
                # Keep the XLU reduce + SMEM write off the critical path of
                # most iterations (may run <= check_every-1 extra iterations).
                pl.when((step % check_every) == (check_every - 1))(do_check)

            # Store f32 state and its bf16 copy together: next iteration's MXU
            # operand is read directly as bf16 (no per-iteration re-cast).
            x_f32[...] = x_new
            x_bf16[...] = x_new.astype(jnp.bfloat16)

        pl.when(done_ref[0] == 0)(run_iter)
        return carry

    lax.fori_loop(0, max_steps, body, 0)

    # Fused epilogue: optional global_add_pool (one-hot [G, N]) followed by the
    # RidgeClassifier decision function.  When batch is None the pool (identity)
    # matmul is skipped entirely at trace time.
    h_bf16 = x_bf16[...]
    if has_pool:
        pooled = jnp.dot(pool_ref[...], h_bf16,
                         preferred_element_type=jnp.float32)
        scores = jnp.dot(pooled.astype(jnp.bfloat16), coef_t_ref[...],
                         preferred_element_type=jnp.float32)
    else:
        scores = jnp.dot(h_bf16, coef_t_ref[...],
                         preferred_element_type=jnp.float32)
    scores_ref[...] = scores + b_ref[...]


def graphesn_fused(u, win_t_pad, wh_t_pad, adj, coef_t_pad, intercept_pad,
                   pool=None, *, threshold=1e-3, max_steps=100, check_every=4):
    """Fused reservoir + (optional) pool + readout.

    u: [N, D_in], win_t_pad: [D_in, H_pad], wh_t_pad: [H_pad, H_pad],
    adj: [N, N], pool: [G, N] or None, coef_t_pad: [H_pad, C_pad],
    intercept_pad: [C_pad] -> scores [N or G, C_pad] f32.
    """
    n = u.shape[0]
    hpad = win_t_pad.shape[1]
    cpad = coef_t_pad.shape[1]
    has_pool = pool is not None
    m = pool.shape[0] if has_pool else n

    kernel = functools.partial(_graphesn_fused_kernel,
                               has_pool=has_pool,
                               threshold_sq=float(threshold) ** 2,
                               max_steps=int(max_steps),
                               check_every=int(check_every))

    # Generation-aware VMEM budget: no grid -> no pipeline double-buffers, so
    # the budget is the resident working set + headroom for Mosaic internal
    # scratch, clamped below the physical per-core VMEM minus a reserve
    # (~120 MiB usable on v5e/v6e, ~56 MiB on v7x).
    bf16_elems = (u.size + win_t_pad.size + wh_t_pad.size + adj.size
                  + coef_t_pad.size + (pool.size if has_pool else 0))
    need = (2 * bf16_elems            # bf16 inputs
            + 4 * cpad                # f32 intercept row
            + 4 * m * cpad            # f32 scores output
            + 4 * n * hpad            # f32 reservoir state scratch
            + 2 * n * hpad            # bf16 state copy (MXU operand)
            + 4 * n * hpad            # f32 hoisted input projection
            + (4 << 20))              # Mosaic internal scratch headroom
    try:
        cap = int(pltpu.get_tpu_info().vmem_capacity_bytes)
    except Exception:                 # older jax / no query available
        cap = 64 << 20                # conservative (v7x-sized) fallback
    vmem_limit = int(min(max(need, 16 << 20), cap - (8 << 20)))

    args = [u.astype(jnp.bfloat16),
            win_t_pad.astype(jnp.bfloat16),
            wh_t_pad.astype(jnp.bfloat16),
            adj.astype(jnp.bfloat16)]
    if has_pool:
        args.append(pool.astype(jnp.bfloat16))
    args += [coef_t_pad.astype(jnp.bfloat16),
             intercept_pad.reshape(1, cpad).astype(jnp.float32)]

    scores = pl.pallas_call(
        kernel,
        out_shape=jax.ShapeDtypeStruct((m, cpad), jnp.float32),
        in_specs=[pl.BlockSpec(memory_space=pltpu.MemorySpace.VMEM)] * len(args),
        out_specs=pl.BlockSpec(memory_space=pltpu.MemorySpace.VMEM),
        scratch_shapes=[
            pltpu.VMEM((n, hpad), jnp.float32),    # f32 reservoir state
            pltpu.VMEM((n, hpad), jnp.bfloat16),   # bf16 state copy (MXU operand)
            pltpu.VMEM((n, hpad), jnp.float32),    # hoisted input projection
            pltpu.SMEM((1,), jnp.int32),           # convergence flag
        ],
        compiler_params=pltpu.CompilerParams(vmem_limit_bytes=vmem_limit),
    )(*args)
    return scores


# ----------------------------------------------------------------------------
# Parameter construction (deterministic, mirrors GraphReservoir.__init__).
# Transposed + lane-padded weights are built ONCE here, not per forward call.
# ----------------------------------------------------------------------------
def make_graph_esn_params(key, input_size, hidden_size, num_classes,
                          rho=0.9, omhega=1.0):
    k1, k2, k3, k4 = jax.random.split(key, 4)
    # 'uniform' initializer -> U(-1, 1)
    w_in = jax.random.uniform(k1, (hidden_size, input_size),
                              minval=-1.0, maxval=1.0) * omhega
    w_h = jax.random.uniform(k2, (hidden_size, hidden_size),
                             minval=-1.0, maxval=1.0)
    # normalise spectral radius on host (eig has no TPU kernel)
    eigs = np.linalg.eigvals(np.asarray(w_h, dtype=np.float64))
    w_h = w_h / float(np.abs(eigs).max()) * rho
    # synthetic RidgeClassifier coefficients (the sklearn readout is not fitted
    # inside forward(); deterministic stand-in weights).
    coef = jax.random.uniform(k3, (num_classes, hidden_size),
                              minval=-0.1, maxval=0.1)
    intercept = jax.random.uniform(k4, (num_classes,),
                                   minval=-0.1, maxval=0.1)

    hpad = _round_up(hidden_size, LANE)
    cpad = _round_up(num_classes, LANE)

    # Zero-padding the hidden dim is exact: padded reservoir units receive zero
    # input and zero recurrence, stay at tanh(0)=0, and contribute nothing to
    # the real units or the convergence norm.
    win_t_pad = jnp.zeros((input_size, hpad), jnp.float32)
    win_t_pad = win_t_pad.at[:, :hidden_size].set(jnp.transpose(w_in))
    wh_t_pad = jnp.zeros((hpad, hpad), jnp.float32)
    wh_t_pad = wh_t_pad.at[:hidden_size, :hidden_size].set(jnp.transpose(w_h))
    coef_t_pad = jnp.zeros((hpad, cpad), jnp.float32)
    coef_t_pad = coef_t_pad.at[:hidden_size, :num_classes].set(jnp.transpose(coef))
    intercept_pad = jnp.full((cpad,), -1e30, jnp.float32)          # pad classes
    intercept_pad = intercept_pad.at[:num_classes].set(intercept)  # never argmax

    return {
        "win_t": win_t_pad,
        "wh_t": wh_t_pad,
        "coef_t": coef_t_pad,
        "intercept": intercept_pad,
        "hidden_size": hidden_size,
        "num_classes": num_classes,
    }


def edge_index_to_dense_adj(edge_index, num_nodes):
    """edge_index: [2, E] int; returns A [N, N] with A[dst, src] += 1."""
    src, dst = edge_index[0], edge_index[1]
    adj = jnp.zeros((num_nodes, num_nodes), jnp.float32)
    return adj.at[dst, src].add(1.0)


def graph_esn_forward(x, edge_index, params, batch=None, num_graphs=None,
                      threshold=1e-3, max_steps=100, check_every=4):
    """Returns predicted integer class labels ([N] or [num_graphs]).

    num_graphs must be passed statically when batch is given (jit-safe).
    """
    n = x.shape[0]
    adj = edge_index_to_dense_adj(edge_index, n)
    if batch is None:
        pool = None                                   # per-node readout: no pool matmul
    else:
        assert num_graphs is not None, "pass num_graphs statically when batch is given"
        pool = (batch[None, :] == jnp.arange(num_graphs)[:, None]).astype(jnp.float32)

    scores = graphesn_fused(
        x, params["win_t"], params["wh_t"], adj,
        params["coef_t"], params["intercept"], pool,
        threshold=threshold, max_steps=max_steps, check_every=check_every)

    scores = scores[:, :params["num_classes"]]
    # RidgeClassifier.predict: classes_[argmax(decision)] with classes_ = 0..C-1
    return jnp.argmax(scores, axis=-1).astype(jnp.int32)


# ----------------------------------------------------------------------------
if __name__ == "__main__":
    key = jax.random.PRNGKey(0)

    N, INPUT_SIZE, HIDDEN_SIZE, NUM_CLASSES = 16, 8, 32, 3

    kx, kp = jax.random.split(key)
    x = jax.random.normal(kx, (N, INPUT_SIZE), dtype=jnp.float32)

    # bidirectional ring graph, [2, E] edge index
    src = np.arange(N)
    dst = (src + 1) % N
    edge_index = jnp.asarray(
        np.stack([np.concatenate([src, dst]),
                  np.concatenate([dst, src])], axis=0), dtype=jnp.int32)

    params = make_graph_esn_params(kp, INPUT_SIZE, HIDDEN_SIZE, NUM_CLASSES,
                                   rho=0.9, omhega=1.0)

    # node-level predictions (batch=None -> no pool input, no pool matmul)
    preds = graph_esn_forward(x, edge_index, params, batch=None,
                              threshold=1e-3, max_steps=100)
    preds = jax.block_until_ready(preds)
    assert preds.shape == (N,) and preds.dtype == jnp.int32

    # graph-level predictions (global_add_pool fused into the same kernel)
    batch = jnp.asarray(np.repeat(np.arange(2), N // 2), dtype=jnp.int32)
    preds_g = graph_esn_forward(x, edge_index, params, batch=batch, num_graphs=2,
                                threshold=1e-3, max_steps=100)
    preds_g = jax.block_until_ready(preds_g)
    assert preds_g.shape == (2,) and preds_g.dtype == jnp.int32

    # TODO(synk): RidgeClassifier.fit (closed-form ridge solve) is host-side
    # sklearn training, not part of the forward hot path; not ported.
    print("KERNEL_OK")
</pallas_src>

<mosaic_0001>
module attributes {stable_mosaic.version = 11 : i64} {
  func.func @_graphesn_fused_kernel(%arg0: memref<16x8xbf16, #tpu.memory_space<vmem>>, %arg1: memref<8x128xbf16, #tpu.memory_space<vmem>>, %arg2: memref<128x128xbf16, #tpu.memory_space<vmem>>, %arg3: memref<16x16xbf16, #tpu.memory_space<vmem>>, %arg4: memref<128x128xbf16, #tpu.memory_space<vmem>>, %arg5: memref<1x128xf32, #tpu.memory_space<vmem>>, %arg6: memref<16x128xf32, #tpu.memory_space<vmem>>, %arg7: memref<16x128xf32, #tpu.memory_space<vmem>>, %arg8: memref<16x128xbf16, #tpu.memory_space<vmem>>, %arg9: memref<16x128xf32, #tpu.memory_space<vmem>>, %arg10: memref<1xi32, #tpu.memory_space<smem>>) attributes {dimension_semantics = [], scalar_prefetch = 0 : i64, scratch_operands = 4 : i64, tpu.core_type = #tpu.core_type<tc>} {
    %c0 = arith.constant 0 : index
    %c0_0 = arith.constant 0 : index
    %0 = vector.load %arg0[%c0, %c0_0] : memref<16x8xbf16, #tpu.memory_space<vmem>>, vector<16x8xbf16>
    %c0_1 = arith.constant 0 : index
    %c0_2 = arith.constant 0 : index
    %1 = vector.load %arg1[%c0_1, %c0_2] : memref<8x128xbf16, #tpu.memory_space<vmem>>, vector<8x128xbf16>
    %cst = arith.constant dense<0.000000e+00> : vector<16x128xf32>
    %2 = tpu.matmul %0, %1, %cst {dimension_numbers = #tpu.dot_dimension_numbers<[1], [0], [0], [1], [0, 0, 1, 1], [], []>} : vector<16x8xbf16>, vector<8x128xbf16>, vector<16x128xf32> -> vector<16x128xf32>
    %c0_3 = arith.constant 0 : index
    %c0_4 = arith.constant 0 : index
    %3 = vector.load %arg9[%c0_3, %c0_4] : memref<16x128xf32, #tpu.memory_space<vmem>>, vector<16x128xf32>
    tpu.vector_store %arg9[%c0_3, %c0_4], %2 {strides = array<i32>} : memref<16x128xf32, #tpu.memory_space<vmem>>, vector<16x128xf32>,
    %cst_5 = arith.constant 0.000000e+00 : f32
    %4 = vector.broadcast %cst_5 : f32 to vector<16x128xf32>
    %c0_6 = arith.constant 0 : index
    %c0_7 = arith.constant 0 : index
    %5 = vector.load %arg7[%c0_6, %c0_7] : memref<16x128xf32, #tpu.memory_space<vmem>>, vector<16x128xf32>
    tpu.vector_store %arg7[%c0_6, %c0_7], %4 {strides = array<i32>} : memref<16x128xf32, #tpu.memory_space<vmem>>, vector<16x128xf32>,
    %cst_8 = arith.constant 0.000000e+00 : bf16
    %6 = vector.broadcast %cst_8 : bf16 to vector<16x128xbf16>
    %c0_9 = arith.constant 0 : index
    %c0_10 = arith.constant 0 : index
    %7 = vector.load %arg8[%c0_9, %c0_10] : memref<16x128xbf16, #tpu.memory_space<vmem>>, vector<16x128xbf16>
    tpu.vector_store %arg8[%c0_9, %c0_10], %6 {strides = array<i32>} : memref<16x128xbf16, #tpu.memory_space<vmem>>, vector<16x128xbf16>,
    %c0_i32 = arith.constant 0 : i32
    %c0_11 = arith.constant 0 : index
    %8 = memref.load %arg10[%c0_11] : memref<1xi32, #tpu.memory_space<smem>>
    memref.store %c0_i32, %arg10[%c0_11] : memref<1xi32, #tpu.memory_space<smem>>
    %c0_i32_12 = arith.constant 0 : i32
    %c100_i32 = arith.constant 100 : i32
    %9 = arith.addi %c0_i32_12, %c100_i32 : i32
    %c1_i32 = arith.constant 1 : i32
    scf.for %arg11 = %c0_i32_12 to %9 step %c1_i32  : i32 {
      %c0_23 = arith.constant 0 : index
      %17 = memref.load %arg10[%c0_23] : memref<1xi32, #tpu.memory_space<smem>>
      %c0_i32_24 = arith.constant 0 : i32
      %18 = arith.cmpi eq, %17, %c0_i32_24 : i32
      %19 = arith.extui %18 : i1 to i32
      %c0_i32_25 = arith.constant 0 : i32
      %20 = arith.cmpi ne, %19, %c0_i32_25 : i32
      scf.if %20 {
        %c0_26 = arith.constant 0 : index
        %c0_27 = arith.constant 0 : index
        %21 = vector.load %arg8[%c0_26, %c0_27] : memref<16x128xbf16, #tpu.memory_space<vmem>>, vector<16x128xbf16>
        %c0_28 = arith.constant 0 : index
        %c0_29 = arith.constant 0 : index
        %22 = vector.load %arg2[%c0_28, %c0_29] : memref<128x128xbf16, #tpu.memory_space<vmem>>, vector<128x128xbf16>
        %cst_30 = arith.constant dense<0.000000e+00> : vector<16x128xf32>
        %23 = tpu.matmul %21, %22, %cst_30 {dimension_numbers = #tpu.dot_dimension_numbers<[1], [0], [0], [1], [0, 0, 1, 1], [], []>} : vector<16x128xbf16>, vector<128x128xbf16>, vector<16x128xf32> -> vector<16x128xf32>
        %c0_31 = arith.constant 0 : index
        %c0_32 = arith.constant 0 : index
        %24 = vector.load %arg3[%c0_31, %c0_32] : memref<16x16xbf16, #tpu.memory_space<vmem>>, vector<16x16xbf16>
        %25 = arith.truncf %23 : vector<16x128xf32> to vector<16x128xbf16>
        %cst_33 = arith.constant dense<0.000000e+00> : vector<16x128xf32>
        %26 = tpu.matmul %24, %25, %cst_33 {dimension_numbers = #tpu.dot_dimension_numbers<[1], [0], [0], [1], [0, 0, 1, 1], [], []>} : vector<16x16xbf16>, vector<16x128xbf16>, vector<16x128xf32> -> vector<16x128xf32>
        %c0_34 = arith.constant 0 : index
        %c0_35 = arith.constant 0 : index
        %27 = vector.load %arg9[%c0_34, %c0_35] : memref<16x128xf32, #tpu.memory_space<vmem>>, vector<16x128xf32>
        %28 = arith.addf %27, %26 : vector<16x128xf32>
        %29 = math.tanh %28 : vector<16x128xf32>
        %c4_i32 = arith.constant 4 : i32
        %c0_i32_36 = arith.constant 0 : i32
        %30 = arith.cmpi eq, %c4_i32, %c0_i32_36 : i32
        %c1_i32_37 = arith.constant 1 : i32
        %31 = arith.select %30, %c1_i32_37, %c4_i32 : i32
        %32 = arith.remsi %arg11, %31 : i32
        %c0_i32_38 = arith.constant 0 : i32
        %33 = arith.cmpi ne, %32, %c0_i32_38 : i32
        %c0_i32_39 = arith.constant 0 : i32
        %34 = arith.cmpi slt, %32, %c0_i32_39 : i32
        %c0_i32_40 = arith.constant 0 : i32
        %35 = arith.cmpi slt, %31, %c0_i32_40 : i32
        %36 = arith.xori %34, %35 : i1
        %37 = arith.andi %36, %33 : i1
        %38 = arith.addi %32, %31 : i32
        %39 = arith.select %37, %38, %32 : i32
        %c3_i32 = arith.constant 3 : i32
        %40 = arith.cmpi eq, %39, %c3_i32 : i32
        %41 = arith.extui %40 : i1 to i32
        %c0_i32_41 = arith.constant 0 : i32
        %42 = arith.cmpi ne, %41, %c0_i32_41 : i32
        scf.if %42 {
          %c0_46 = arith.constant 0 : index
          %c0_47 = arith.constant 0 : index
          %46 = vector.load %arg7[%c0_46, %c0_47] : memref<16x128xf32, #tpu.memory_space<vmem>>, vector<16x128xf32>
          %47 = arith.subf %29, %46 : vector<16x128xf32>
          %48 = arith.mulf %47, %47 : vector<16x128xf32>
          %49 = vector.shape_cast %48 : vector<16x128xf32> to vector<1x16x128xf32>
          %cst_48 = arith.constant dense<0.000000e+00> : vector<1xf32>
          %50 = vector.multi_reduction <add>, %49, %cst_48 [1, 2] : vector<1x16x128xf32> to vector<1xf32>
          %51 = vector.shape_cast %50 : vector<1xf32> to vector<1x1x1xf32>
          %52 = vector.extract %51[0, 0, 0] : f32 from vector<1x1x1xf32>
          %cst_49 = arith.constant 9.99999997E-7 : f32
          %53 = arith.cmpf ole, %52, %cst_49 : f32
          %c1_i32_50 = arith.constant 1 : i32
          %c0_i32_51 = arith.constant 0 : i32
          %54 = arith.select %53, %c1_i32_50, %c0_i32_51 : i32
          %c0_52 = arith.constant 0 : index
          %55 = memref.load %arg10[%c0_52] : memref<1xi32, #tpu.memory_space<smem>>
          memref.store %54, %arg10[%c0_52] : memref<1xi32, #tpu.memory_space<smem>>
        } else {
        }
        %c0_42 = arith.constant 0 : index
        %c0_43 = arith.constant 0 : index
        %43 = vector.load %arg7[%c0_42, %c0_43] : memref<16x128xf32, #tpu.memory_space<vmem>>, vector<16x128xf32>
        tpu.vector_store %arg7[%c0_42, %c0_43], %29 {strides = array<i32>} : memref<16x128xf32, #tpu.memory_space<vmem>>, vector<16x128xf32>,
        %44 = arith.truncf %29 : vector<16x128xf32> to vector<16x128xbf16>
        %c0_44 = arith.constant 0 : index
        %c0_45 = arith.constant 0 : index
        %45 = vector.load %arg8[%c0_44, %c0_45] : memref<16x128xbf16, #tpu.memory_space<vmem>>, vector<16x128xbf16>
        tpu.vector_store %arg8[%c0_44, %c0_45], %44 {strides = array<i32>} : memref<16x128xbf16, #tpu.memory_space<vmem>>, vector<16x128xbf16>,
      } else {
      }
    }
    %c100_i32_13 = arith.constant 100 : i32
    %c0_14 = arith.constant 0 : index
    %c0_15 = arith.constant 0 : index
    %10 = vector.load %arg8[%c0_14, %c0_15] : memref<16x128xbf16, #tpu.memory_space<vmem>>, vector<16x128xbf16>
    %c0_16 = arith.constant 0 : index
    %c0_17 = arith.constant 0 : index
    %11 = vector.load %arg4[%c0_16, %c0_17] : memref<128x128xbf16, #tpu.memory_space<vmem>>, vector<128x128xbf16>
    %cst_18 = arith.constant dense<0.000000e+00> : vector<16x128xf32>
    %12 = tpu.matmul %10, %11, %cst_18 {dimension_numbers = #tpu.dot_dimension_numbers<[1], [0], [0], [1], [0, 0, 1, 1], [], []>} : vector<16x128xbf16>, vector<128x128xbf16>, vector<16x128xf32> -> vector<16x128xf32>
    %c0_19 = arith.constant 0 : index
    %c0_20 = arith.constant 0 : index
    %13 = vector.load %arg5[%c0_19, %c0_20] : memref<1x128xf32, #tpu.memory_space<vmem>>, vector<1x128xf32>
    %14 = vector.broadcast %13 : vector<1x128xf32> to vector<16x128xf32>
    %15 = arith.addf %12, %14 : vector<16x128xf32>
    %c0_21 = arith.constant 0 : index
    %c0_22 = arith.constant 0 : index
    %16 = vector.load %arg6[%c0_21, %c0_22] : memref<16x128xf32, #tpu.memory_space<vmem>>, vector<16x128xf32>
    tpu.vector_store %arg6[%c0_21, %c0_22], %15 {strides = array<i32>} : memref<16x128xf32, #tpu.memory_space<vmem>>, vector<16x128xf32>,
    return
  }
}

</mosaic_0001>

<llo_original>
// kernel: tpu_custom_call.1
$region0: #{tpu_custom_call.1}
  #allocation0 [shape = 'u32[]', space=smem, size = 0x4, offset = 0x4, fixed_abs, tag = 'smem constant byte address 0x4 - core index']
  #allocation1 [shape = 'u32[144,128]{1,0:T(1,128)}', space=vmem, size = 0x12000, scoped, tag = 'internal scratch']
  #allocation2 [shape = 'f32[16,128]{1,0:T(8,128)}', space=vmem, size = 0x2000, scoped, tag = 'scratch operand']
  #allocation3 [shape = 'bf16[16,128]{1,0:T(16,128)(2,1)}', space=vmem, size = 0x1000, scoped, tag = 'scratch operand']
  #allocation4 [shape = 'f32[16,128]{1,0:T(8,128)}', space=vmem, size = 0x2000, scoped, tag = 'scratch operand']
  #allocation5 [shape = 's32[1]{0:T(128)}', space=smem, size = 0x200, scoped, tag = 'scratch operand']
  %s0 = inlined_call_operand.vmem [shape: bf16[16,8], index: 0, kind: input, shape index: {}]
  %s1 = inlined_call_operand.vmem [shape: bf16[8,128], index: 1, kind: input, shape index: {}]
  %s2 = inlined_call_operand.hbm [shape: bf16[128,128], index: 2, kind: input, shape index: {}]
  %s3 = inlined_call_operand.vmem [shape: bf16[16,16], index: 3, kind: input, shape index: {}]
  %s4 = inlined_call_operand.hbm [shape: bf16[128,128], index: 4, kind: input, shape index: {}]
  %s5 = inlined_call_operand.vmem [shape: f32[1,128], index: 5, kind: input, shape index: {}]
  %s6 = inlined_call_operand.hbm [shape: f32[16,128], index: 6, kind: output, shape index: {}]
  %s7 = sld [smem:[#allocation0]]
  $region57: #{tpu_custom_call.1} parent=0
    _
  %s9 = ssub.s32 1, %s7
  %s10 = scalar_select 0, %s9, %s7
  $region1: #{tpu_custom_call.1} parent=0
    #allocation6 [shape = 'u8[32768]{0}', space=vmem, size = 0x8000, scoped, tag = 'input window, operand 2, single buffered']
    #allocation7 [shape = 's32[1]{0}', space=sflag, size = 0x4, scoped, tag = 'scoped memory for tpu_custom_call.1']
    #allocation8 [shape = 's32[1]{0}', space=sflag, size = 0x4, scoped, tag = 'scoped memory for tpu_custom_call.1']
    #allocation9 [shape = 'u8[32768]{0}', space=vmem, size = 0x8000, scoped, tag = 'input window, operand 4, single buffered']
    #allocation10 [shape = 's32[1]{0}', space=sflag, size = 0x4, scoped, tag = 'scoped memory for tpu_custom_call.1']
    #allocation11 [shape = 'u8[8192]{0}', space=vmem, size = 0x2000, scoped, tag = 'output window, operand 0, single buffered']
    %11 = vsyncpa [#allocation7], 0
    %12 = vsyncpa [#allocation10], 0
    %13 = vsyncpa [#allocation8], 0
    // Predicated region
    $region2: #{tpu_custom_call.1} parent=1 // pred_check
      _
    $region3: #{tpu_custom_call.1} parent=1 // pred_check_branch
      %15 = sbr.rel (0) target = $region5
    $region4: #{tpu_custom_call.1} parent=1 // pred_region
      _
    $region5: #{tpu_custom_call.1} parent=1 // pred_fallthru
      _
    // Predicated region
    $region6: #{tpu_custom_call.1} parent=1 // pred_check
      _
    $region7: #{tpu_custom_call.1} parent=1 // pred_check_branch
      %17 = sbr.rel (0) target = $region9
    $region8: #{tpu_custom_call.1} parent=1 // pred_region
      _
    $region9: #{tpu_custom_call.1} parent=1 // pred_fallthru
      _
    // Predicated region
    $region10: #{tpu_custom_call.1} parent=1 // pred_check
      _
    $region11: #{tpu_custom_call.1} parent=1 // pred_check_branch
      %19 = sbr.rel (0) target = $region13
    $region12: #{tpu_custom_call.1} parent=1 // pred_region
      %s21 = ssub.s32 1024, 1024
      %22 = vsyncadd [#allocation7], %s21
      %s23 = sshll.u32 [#allocation6], 4
      %s24 = int_to_ptr.vmem [resolvable:$true] %s23
      %29 = dma.hbm_to_vmem [thread:$0]  %s2, 1024, %s24, [#allocation7], 64, 64, 4
    $region13: #{tpu_custom_call.1} parent=1 // pred_fallthru
      _
    // Predicated region
    $region14: #{tpu_custom_call.1} parent=1 // pred_check
      _
    $region15: #{tpu_custom_call.1} parent=1 // pred_check_branch
      %31 = sbr.rel (0) target = $region17
    $region16: #{tpu_custom_call.1} parent=1 // pred_region
      _
    $region17: #{tpu_custom_call.1} parent=1 // pred_fallthru
      _
    // Predicated region
    $region18: #{tpu_custom_call.1} parent=1 // pred_check
      _
    $region19: #{tpu_custom_call.1} parent=1 // pred_check_branch
      %33 = sbr.rel (0) target = $region21
    $region20: #{tpu_custom_call.1} parent=1 // pred_region
      %s35 = ssub.s32 1024, 1024
      %36 = vsyncadd [#allocation10], %s35
      %s37 = sshll.u32 [#allocation9], 4
      %s38 = int_to_ptr.vmem [resolvable:$true] %s37
      %43 = dma.hbm_to_vmem [thread:$0]  %s4, 1024, %s38, [#allocation10], 64, 64, 4
    $region21: #{tpu_custom_call.1} parent=1 // pred_fallthru
      _
    // Predicated region
    $region22: #{tpu_custom_call.1} parent=1 // pred_check
      _
    $region23: #{tpu_custom_call.1} parent=1 // pred_check_branch
      %45 = sbr.rel (0) target = $region25
    $region24: #{tpu_custom_call.1} parent=1 // pred_region
      _
    $region25: #{tpu_custom_call.1} parent=1 // pred_fallthru
      _
    // Predicated region
    $region26: #{tpu_custom_call.1} parent=1 // pred_check
      _
    $region27: #{tpu_custom_call.1} parent=1 // pred_check_branch
      %47 = sbr.rel (0) target = $region29
    $region28: #{tpu_custom_call.1} parent=1 // pred_region
      %48 = dma.done [#allocation7], 1024
    $region29: #{tpu_custom_call.1} parent=1 // pred_fallthru
      _
    // Predicated region
    $region30: #{tpu_custom_call.1} parent=1 // pred_check
      _
    $region31: #{tpu_custom_call.1} parent=1 // pred_check_branch
      %50 = sbr.rel (0) target = $region33
    $region32: #{tpu_custom_call.1} parent=1 // pred_region
      %51 = dma.done [#allocation10], 1024
    $region33: #{tpu_custom_call.1} parent=1 // pred_fallthru
      _
    %v53 = vld [vmem:[%s0] sm:$0xf]
    %v54 = vld [vmem:[%s0 + $0x4] sm:$0xf]
    %v55 = vld [vmem:[%s1] sm:$0xf]
    %v58 = vunpack.c.l.b16 %v53
    %v59 = vunpack.c.l.b16 %v54
    %v60 = vpack.c.b16 %v59, %v58
    %vm61 = vcmask 64512
    %v63 = vsel %vm61, %v60, 0
    %vm65 = vcmask 1043456
    %v67 = vsel %vm65, %v55, 0
    %69 = vmatprep.subr.bf16.mxu0 0
    %70 = vmatpush1.bf16.msra.mxu0 %v67
    %71 = vmatprep.subr.bf16.mxu0 0
    %72 = vmatpush1.bf16.msra.mxu0 0
    %73 = vmatprep.subr.bf16.mxu0 0
    %74 = vmatpush1.bf16.msra.mxu0 0
    %75 = vmatprep.subr.bf16.mxu0 0
    %76 = vmatpush1.bf16.msra.mxu0 0
    %77 = vmatprep.subr.bf16.mxu0 0
    %78 = vmatpush1.bf16.msra.mxu0 0
    %79 = vmatprep.subr.bf16.mxu0 0
    %80 = vmatpush1.bf16.msra.mxu0 0
    %81 = vmatprep.subr.bf16.mxu0 0
    %82 = vmatpush1.bf16.msra.mxu0 0
    %83 = vmatprep.subr.bf16.mxu0 0
    %84 = vmatpush1.bf16.msra.mxu0 0
    %85 = vmatprep.subr.bf16.mxu0 0
    %86 = vmatpush1.bf16.msra.mxu0 0
    %87 = vmatprep.subr.bf16.mxu0 0
    %88 = vmatpush1.bf16.msra.mxu0 0
    %89 = vmatprep.subr.bf16.mxu0 0
    %90 = vmatpush1.bf16.msra.mxu0 0
    %91 = vmatprep.subr.bf16.mxu0 0
    %92 = vmatpush1.bf16.msra.mxu0 0
    %93 = vmatprep.subr.bf16.mxu0 0
    %94 = vmatpush1.bf16.msra.mxu0 0
    %95 = vmatprep.subr.bf16.mxu0 0
    %96 = vmatpush1.bf16.msra.mxu0 0
    %97 = vmatprep.subr.bf16.mxu0 0
    %98 = vmatpush1.bf16.msra.mxu0 0
    %99 = vmatprep.subr.bf16.mxu0 0
    %100 = vmatpush1.bf16.msra.mxu0 0
    %101 = vmatprep.mubr.bf16.mxu0 0
    %102 = vmatmul.mubr.bf16.gmra.mrb[0].mxu0 %v63
    %v103 = vpop.f32.mrb[0].mxu0
    %v104 = vadd.f32 0.0, %v103
    %v105 = vpop.f32.mrb[0].mxu0
    %v106 = vpop.f32.mrb[0].mxu0
    %v107 = vadd.f32 0.0, %v106
    %v108 = vpop.f32.mrb[0].mxu0
    %109 = vdwg.mxu0
    %110 = vst [vmem:[#allocation4] sm:$0xff] %v104
    %111 = vst [vmem:[#allocation4 + $0x8] sm:$0xff] %v107
    %112 = vst [vmem:[#allocation2] sm:$0xff] 0.0
    %113 = vst [vmem:[#allocation2 + $0x8] sm:$0xff] 0.0
    %114 = vst [vmem:[#allocation3] sm:$0xff] 0
    %s115 = scalar_lea.smem [#allocation5], 0
    %116 = sst [smem:[%s115]] 0
    loop: start=0, step=1, limit=100
    $region34: #{tpu_custom_call.1} parent=1 // loop_pre_header
      _
    $region35: #{tpu_custom_call.1} parent=1 // loop_header
      %s118 = sphi 0, %s122
      %p119 = scmp.ge.s32.totalorder %s118, 100
    $region36: #{tpu_custom_call.1} parent=1 // loop_header_branch
      %121 = sbr.rel (%p119) target = $region40
    $region37: #{tpu_custom_call.1} parent=1 // loop_body
      %s123 = sld [smem:[#allocation5]]
      %p124 = scmp.eq.s32.totalorder %s123, 0
      // Predicated region
      $region41: #{tpu_custom_call.1} parent=37 // pred_check
        %p125 = pneg %p124
      $region42: #{tpu_custom_call.1} parent=37 // pred_check_branch
        %127 = sbr.rel (%p125) target = $region44
      $region43: #{tpu_custom_call.1} parent=37 // pred_region
        %v128 = vld [vmem:[#allocation3] sm:$0xff]
        %v129 = vld [vmem:[#allocation6] sm:$0xf]
        %v130 = vld [vmem:[#allocation6 + $0x4] sm:$0xf]
        %v131 = vld [vmem:[#allocation6 + $0x8] sm:$0xf]
        %v132 = vld [vmem:[#allocation6 + $0xc] sm:$0xf]
        %v133 = vld [vmem:[#allocation6 + $0x10] sm:$0xf]
        %v134 = vld [vmem:[#allocation6 + $0x14] sm:$0xf]
        %v135 = vld [vmem:[#allocation6 + $0x18] sm:$0xf]
        %v136 = vld [vmem:[#allocation6 + $0x1c] sm:$0xf]
        %v137 = vld [vmem:[#allocation6 + $0x20] sm:$0xf]
        %v138 = vld [vmem:[#allocation6 + $0x24] sm:$0xf]
        %v139 = vld [vmem:[#allocation6 + $0x28] sm:$0xf]
        %v140 = vld [vmem:[#allocation6 + $0x2c] sm:$0xf]
        %v141 = vld [vmem:[#allocation6 + $0x30] sm:$0xf]
        %v142 = vld [vmem:[#allocation6 + $0x34] sm:$0xf]
        %v143 = vld [vmem:[#allocation6 + $0x38] sm:$0xf]
        %v144 = vld [vmem:[#allocation6 + $0x3c] sm:$0xf]
        %v161 = vunpack.c.l.b16 %v129
        %v162 = vunpack.c.l.b16 %v130
        %v163 = vunpack.c.l.b16 %v131
        %v164 = vunpack.c.l.b16 %v132
        %v165 = vunpack.c.l.b16 %v133
        %v166 = vunpack.c.l.b16 %v134
        %v167 = vunpack.c.l.b16 %v135
        %v168 = vunpack.c.l.b16 %v136
        %v169 = vunpack.c.l.b16 %v137
        %v170 = vunpack.c.l.b16 %v138
        %v171 = vunpack.c.l.b16 %v139
        %v172 = vunpack.c.l.b16 %v140
        %v173 = vunpack.c.l.b16 %v141
        %v174 = vunpack.c.l.b16 %v142
        %v175 = vunpack.c.l.b16 %v143
        %v176 = vunpack.c.l.b16 %v144
        %v177 = vpack.c.b16 %v162, %v161
        %v178 = vpack.c.b16 %v164, %v163
        %v179 = vpack.c.b16 %v166, %v165
        %v180 = vpack.c.b16 %v168, %v167
        %v181 = vpack.c.b16 %v170, %v169
        %v182 = vpack.c.b16 %v172, %v171
        %v183 = vpack.c.b16 %v174, %v173
        %v184 = vpack.c.b16 %v176, %v175
        %193 = vmatprep.subr.bf16.mxu0 0
        %194 = vmatpush1.bf16.msra.mxu0 %v177
        %195 = vmatprep.subr.bf16.mxu0 0
        %196 = vmatpush1.bf16.msra.mxu0 %v178
        %197 = vmatprep.subr.bf16.mxu0 0
        %198 = vmatpush1.bf16.msra.mxu0 %v179
        %199 = vmatprep.subr.bf16.mxu0 0
        %200 = vmatpush1.bf16.msra.mxu0 %v180
        %201 = vmatprep.subr.bf16.mxu0 0
        %202 = vmatpush1.bf16.msra.mxu0 %v181
        %203 = vmatprep.subr.bf16.mxu0 0
        %204 = vmatpush1.bf16.msra.mxu0 %v182
        %205 = vmatprep.subr.bf16.mxu0 0
        %206 = vmatpush1.bf16.msra.mxu0 %v183
        %207 = vmatprep.subr.bf16.mxu0 0
        %208 = vmatpush1.bf16.msra.mxu0 %v184
        %209 = vmatprep.subr.bf16.mxu0 0
        %210 = vmatpush1.bf16.msra.mxu0 0
        %211 = vmatprep.subr.bf16.mxu0 0
        %212 = vmatpush1.bf16.msra.mxu0 0
        %213 = vmatprep.subr.bf16.mxu0 0
        %214 = vmatpush1.bf16.msra.mxu0 0
        %215 = vmatprep.subr.bf16.mxu0 0
        %216 = vmatpush1.bf16.msra.mxu0 0
        %217 = vmatprep.subr.bf16.mxu0 0
        %218 = vmatpush1.bf16.msra.mxu0 0
        %219 = vmatprep.subr.bf16.mxu0 0
        %220 = vmatpush1.bf16.msra.mxu0 0
        %221 = vmatprep.subr.bf16.mxu0 0
        %222 = vmatpush1.bf16.msra.mxu0 0
        %223 = vmatprep.subr.bf16.mxu0 0
        %224 = vmatpush1.bf16.msra.mxu0 0
        %225 = vmatprep.mubr.bf16.mxu0 0
        %226 = vmatmul.mubr.bf16.gmra.mrb[0].mxu0 %v128
        %v227 = vpop.f32.mrb[0].mxu0
        %v228 = vadd.f32 0.0, %v227
        %v229 = vpop.f32.mrb[0].mxu0
        %v230 = vpop.f32.mrb[0].mxu0
        %v231 = vadd.f32 0.0, %v230
        %v232 = vpop.f32.mrb[0].mxu0
        %233 = vdwg.mxu0
        %v234 = vld [vmem:[%s3] sm:$0xf]
        %v235 = vld [vmem:[%s3 + $0x4] sm:$0xf]
        %v236 = vpack.c.bf16 %v231, %v228
        %v239 = vunpack.c.l.b16 %v234
        %v240 = vunpack.c.l.b16 %v235
        %v241 = vpack.c.b16 %v240, %v239
        %vm242 = vcmask 130048
        %v244 = vsel %vm242, %v241, 0
        %246 = vmatprep.subr.bf16.mxu0 0
        %247 = vmatpush1.bf16.msra.mxu0 %v236
        %248 = vmatprep.subr.bf16.mxu0 0
        %249 = vmatpush1.bf16.msra.mxu0 0
        %250 = vmatprep.subr.bf16.mxu0 0
        %251 = vmatpush1.bf16.msra.mxu0 0
        %252 = vmatprep.subr.bf16.mxu0 0
        %253 = vmatpush1.bf16.msra.mxu0 0
        %254 = vmatprep.subr.bf16.mxu0 0
        %255 = vmatpush1.bf16.msra.mxu0 0
        %256 = vmatprep.subr.bf16.mxu0 0
        %257 = vmatpush1.bf16.msra.mxu0 0
        %258 = vmatprep.subr.bf16.mxu0 0
        %259 = vmatpush1.bf16.msra.mxu0 0
        %260 = vmatprep.subr.bf16.mxu0 0
        %261 = vmatpush1.bf16.msra.mxu0 0
        %262 = vmatprep.subr.bf16.mxu0 0
        %263 = vmatpush1.bf16.msra.mxu0 0
        %264 = vmatprep.subr.bf16.mxu0 0
        %265 = vmatpush1.bf16.msra.mxu0 0
        %266 = vmatprep.subr.bf16.mxu0 0
        %267 = vmatpush1.bf16.msra.mxu0 0
        %268 = vmatprep.subr.bf16.mxu0 0
        %269 = vmatpush1.bf16.msra.mxu0 0
        %270 = vmatprep.subr.bf16.mxu0 0
        %271 = vmatpush1.bf16.msra.mxu0 0
        %272 = vmatprep.subr.bf16.mxu0 0
        %273 = vmatpush1.bf16.msra.mxu0 0
        %274 = vmatprep.subr.bf16.mxu0 0
        %275 = vmatpush1.bf16.msra.mxu0 0
        %276 = vmatprep.subr.bf16.mxu0 0
        %277 = vmatpush1.bf16.msra.mxu0 0
        %278 = vmatprep.mubr.bf16.mxu0 0
        %279 = vmatmul.mubr.bf16.gmra.mrb[0].mxu0 %v244
        %v280 = vpop.f32.mrb[0].mxu0
        %v281 = vadd.f32 0.0, %v280
        %v282 = vpop.f32.mrb[0].mxu0
        %v283 = vpop.f32.mrb[0].mxu0
        %v284 = vadd.f32 0.0, %v283
        %v285 = vpop.f32.mrb[0].mxu0
        %286 = vdwg.mxu0
        %v287 = vld [vmem:[#allocation4] sm:$0xff]
        %v288 = vld [vmem:[#allocation4 + $0x8] sm:$0xff]
        %v289 = vadd.f32 %v287, %v281
        %v290 = vadd.f32 %v288, %v284
        %v291 = vtanh.pop %v289
        %v292 = vtanh.pop %v290
        %p293 = scmp.lt.s32.totalorder %s118, 0
        %s294 = ssub.s32 0, %s118
        %s295 = scalar_select %p293, %s294, %s118
        %s296 = sand.u32 %s295, 3
        %s297 = ssub.s32 0, %s296
        %s298 = scalar_select %p293, %s297, %s296
        %p299 = scmp.ne.s32.totalorder %s298, 0
        %p300 = scmp.lt.s32.totalorder %s298, 0
        %p301 = pnand %p300, %p299
        %p302 = pneg %p301
        %s303 = sadd.s32 %s298, 4
        %s304 = scalar_select %p302, %s303, %s298
        %p305 = scmp.eq.s32.totalorder %s304, 3
        // Predicated region
        $region45: #{tpu_custom_call.1} parent=43 // pred_check
          %p306 = pneg %p305
        $region46: #{tpu_custom_call.1} parent=43 // pred_check_branch
          %308 = sbr.rel (%p306) target = $region48
        $region47: #{tpu_custom_call.1} parent=43 // pred_region
          %v309 = vld [vmem:[#allocation2] sm:$0xff]
          %v310 = vld [vmem:[#allocation2 + $0x8] sm:$0xff]
          %v311 = vsub.f32 %v291, %v309
          %v312 = vsub.f32 %v292, %v310
          %v313 = vmul.f32 %v311, %v311
          %v314 = vmul.f32 %v312, %v312
          %v315 = vadd.f32 %v313, %v314
          %316 = vadd.xlane.f32.xlu0 %v315
          %v317 = vpop.xlane.xlu0 %316
          %v318 = vrot.slane %v317, 4
          %v319 = vadd.f32 %v317, %v318
          %v320 = vrot.slane %v319, 2
          %v321 = vadd.f32 %v319, %v320
          %v322 = vrot.slane %v321, 1
          %v323 = vadd.f32 %v321, %v322
          %s324 = vtos %v323
          %p325 = scmp.le.f32.partialorder %s324, 1e-06
          %s326 = scalar_select %p325, 1, 0
          %327 = sst [smem:[%s115]] %s326
        $region48: #{tpu_custom_call.1} parent=43 // pred_fallthru
          _
        %328 = vst [vmem:[#allocation2] sm:$0xff] %v291
        %329 = vst [vmem:[#allocation2 + $0x8] sm:$0xff] %v292
        %v330 = vpack.c.bf16 %v292, %v291
        %331 = vst [vmem:[#allocation3] sm:$0xff] %v330
      $region44: #{tpu_custom_call.1} parent=37 // pred_fallthru
        _
    $region38: #{tpu_custom_call.1} parent=1 // loop_footer
      %s122 = sadd.s32 1, %s118
    $region39: #{tpu_custom_call.1} parent=1 // loop_footer_branch
      %117 = sbr.rel target = $region35
    $region40: #{tpu_custom_call.1} parent=1 // loop_exit
      _
    %v332 = vld [vmem:[#allocation3] sm:$0xff]
    %v333 = vld [vmem:[#allocation9] sm:$0xf]
    %v334 = vld [vmem:[#allocation9 + $0x4] sm:$0xf]
    %v335 = vld [vmem:[#allocation9 + $0x8] sm:$0xf]
    %v336 = vld [vmem:[#allocation9 + $0xc] sm:$0xf]
    %v337 = vld [vmem:[#allocation9 + $0x10] sm:$0xf]
    %v338 = vld [vmem:[#allocation9 + $0x14] sm:$0xf]
    %v339 = vld [vmem:[#allocation9 + $0x18] sm:$0xf]
    %v340 = vld [vmem:[#allocation9 + $0x1c] sm:$0xf]
    %v341 = vld [vmem:[#allocation9 + $0x20] sm:$0xf]
    %v342 = vld [vmem:[#allocation9 + $0x24] sm:$0xf]
    %v343 = vld [vmem:[#allocation9 + $0x28] sm:$0xf]
    %v344 = vld [vmem:[#allocation9 + $0x2c] sm:$0xf]
    %v345 = vld [vmem:[#allocation9 + $0x30] sm:$0xf]
    %v346 = vld [vmem:[#allocation9 + $0x34] sm:$0xf]
    %v347 = vld [vmem:[#allocation9 + $0x38] sm:$0xf]
    %v348 = vld [vmem:[#allocation9 + $0x3c] sm:$0xf]
    %v349 = vld [vmem:[%s5] sm:$0x1]
    %v351 = vlaneseq
    %v352 = vshrl.u32 %v351, 7
    %v353 = vsub.s32 0, %v352
    %v354 = vrot.slane %v349, %v353
    %v372 = vunpack.c.l.b16 %v333
    %v373 = vunpack.c.l.b16 %v334
    %v374 = vunpack.c.l.b16 %v335
    %v375 = vunpack.c.l.b16 %v336
    %v376 = vunpack.c.l.b16 %v337
    %v377 = vunpack.c.l.b16 %v338
    %v378 = vunpack.c.l.b16 %v339
    %v379 = vunpack.c.l.b16 %v340
    %v380 = vunpack.c.l.b16 %v341
    %v381 = vunpack.c.l.b16 %v342
    %v382 = vunpack.c.l.b16 %v343
    %v383 = vunpack.c.l.b16 %v344
    %v384 = vunpack.c.l.b16 %v345
    %v385 = vunpack.c.l.b16 %v346
    %v386 = vunpack.c.l.b16 %v347
    %v387 = vunpack.c.l.b16 %v348
    %v388 = vpack.c.b16 %v373, %v372
    %v389 = vpack.c.b16 %v375, %v374
    %v390 = vpack.c.b16 %v377, %v376
    %v391 = vpack.c.b16 %v379, %v378
    %v392 = vpack.c.b16 %v381, %v380
    %v393 = vpack.c.b16 %v383, %v382
    %v394 = vpack.c.b16 %v385, %v384
    %v395 = vpack.c.b16 %v387, %v386
    %404 = vmatprep.subr.bf16.mxu0 0
    %405 = vmatpush1.bf16.msra.mxu0 %v388
    %406 = vmatprep.subr.bf16.mxu0 0
    %407 = vmatpush1.bf16.msra.mxu0 %v389
    %408 = vmatprep.subr.bf16.mxu0 0
    %409 = vmatpush1.bf16.msra.mxu0 %v390
    %410 = vmatprep.subr.bf16.mxu0 0
    %411 = vmatpush1.bf16.msra.mxu0 %v391
    %412 = vmatprep.subr.bf16.mxu0 0
    %413 = vmatpush1.bf16.msra.mxu0 %v392
    %414 = vmatprep.subr.bf16.mxu0 0
    %415 = vmatpush1.bf16.msra.mxu0 %v393
    %416 = vmatprep.subr.bf16.mxu0 0
    %417 = vmatpush1.bf16.msra.mxu0 %v394
    %418 = vmatprep.subr.bf16.mxu0 0
    %419 = vmatpush1.bf16.msra.mxu0 %v395
    %420 = vmatprep.subr.bf16.mxu0 0
    %421 = vmatpush1.bf16.msra.mxu0 0
    %422 = vmatprep.subr.bf16.mxu0 0
    %423 = vmatpush1.bf16.msra.mxu0 0
    %424 = vmatprep.subr.bf16.mxu0 0
    %425 = vmatpush1.bf16.msra.mxu0 0
    %426 = vmatprep.subr.bf16.mxu0 0
    %427 = vmatpush1.bf16.msra.mxu0 0
    %428 = vmatprep.subr.bf16.mxu0 0
    %429 = vmatpush1.bf16.msra.mxu0 0
    %430 = vmatprep.subr.bf16.mxu0 0
    %431 = vmatpush1.bf16.msra.mxu0 0
    %432 = vmatprep.subr.bf16.mxu0 0
    %433 = vmatpush1.bf16.msra.mxu0 0
    %434 = vmatprep.subr.bf16.mxu0 0
    %435 = vmatpush1.bf16.msra.mxu0 0
    %436 = vmatprep.mubr.bf16.mxu0 0
    %437 = vmatmul.mubr.bf16.gmra.mrb[0].mxu0 %v332
    %v438 = vpop.f32.mrb[0].mxu0
    %v439 = vadd.f32 %v354, %v438
    %v440 = vpop.f32.mrb[0].mxu0
    %v441 = vpop.f32.mrb[0].mxu0
    %v442 = vadd.f32 %v354, %v441
    %v443 = vpop.f32.mrb[0].mxu0
    %444 = vdwg.mxu0
    %445 = vst [vmem:[#allocation11] sm:$0xff] %v439
    %446 = vst [vmem:[#allocation11 + $0x8] sm:$0xff] %v442
    // Predicated region
    $region49: #{tpu_custom_call.1} parent=1 // pred_check
      _
    $region50: #{tpu_custom_call.1} parent=1 // pred_check_branch
      %448 = sbr.rel (0) target = $region52
    $region51: #{tpu_custom_call.1} parent=1 // pred_region
      %s450 = ssub.s32 256, 256
      %451 = vsyncadd [#allocation8], %s450
      %s452 = sshll.u32 [#allocation11], 4
      %s453 = int_to_ptr.vmem [resolvable:$true] %s452
      %458 = dma.vmem_to_hbm [thread:$0]  %s453, 256, %s6, [#allocation8], 128, 128, 8
    $region52: #{tpu_custom_call.1} parent=1 // pred_fallthru
      _
    // Predicated region
    $region53: #{tpu_custom_call.1} parent=1 // pred_check
      _
    $region54: #{tpu_custom_call.1} parent=1 // pred_check_branch
      %460 = sbr.rel (0) target = $region56
    $region55: #{tpu_custom_call.1} parent=1 // pred_region
      %461 = dma.done [#allocation8], 256
    $region56: #{tpu_custom_call.1} parent=1 // pred_fallthru
      _
    %462 = vsyncpa [#allocation7], 1
    %463 = vsyncpa [#allocation10], 1
    %464 = vsyncpa [#allocation8], 1

</llo_original>
